<compile_context>
chip_gen: v6e
topology: v6e:2x2x1
jax: 0.10.0
libtpu: 0.0.40
codegen_flags: <defaults>
</compile_context>

<pallas_src>
import functools

import numpy as np
import jax
import jax.numpy as jnp
from jax.experimental import pallas as pl
from jax.experimental.pallas import tpu as pltpu

LAMBDA_OPACITY = 0.001
LAMBDA_DISTORTION = 0.001


# --------------------------------------------------------------------------------------
# Kernels (everything is laid out channel/sample-major, rays on lanes)
# --------------------------------------------------------------------------------------
def _elemwise_body(rgb_ref, tgt_ref, op_ref, rgb_out_ref, op_out_ref, lambda_opacity):
    """rgb: (3, T) squared error; opacity: (1, T) entropy regularizer."""
    diff = rgb_ref[...] - tgt_ref[...]
    rgb_out_ref[...] = diff * diff
    o = op_ref[...] + 1e-10
    op_out_ref[...] = lambda_opacity * (-o * jnp.log(o))


def _elemwise_kernel(rgb_ref, tgt_ref, op_ref, rgb_out_ref, op_out_ref, *, lambda_opacity):
    _elemwise_body(rgb_ref, tgt_ref, op_ref, rgb_out_ref, op_out_ref, lambda_opacity)


def _fused_kernel(rgb_ref, tgt_ref, op_ref, w_ref, d_ref, t_ref, tri_ref,
                  rgb_out_ref, op_out_ref, dist_ref, *,
                  lambda_opacity, lambda_distortion):
    """Fused elementwise losses + per-ray distortion loss.

    Distortion (DVGO-v2 / vren formulation), per ray r:
        loss[r] = 2 * sum_i w_i * (t_i * sum_{j<i} w_j - sum_{j<i} w_j t_j)
                  + (1/3) * sum_i w_i^2 * delta_i
    Slabs are (S, T) with rays on lanes; padding positions have w == 0 so they
    contribute nothing.  The exclusive prefix sums along S are a tiny (S,S) @
    (S,T) matmul with a strictly-lower-triangular matrix (MXU, N=T lane-dense),
    hoisted tri stays VMEM-resident across grid steps.
    """
    _elemwise_body(rgb_ref, tgt_ref, op_ref, rgb_out_ref, op_out_ref, lambda_opacity)

    w = w_ref[...]        # (S, T)
    dlt = d_ref[...]      # (S, T)
    t = t_ref[...]        # (S, T)
    tri = tri_ref[...]    # (S, S), tri[i, j] = 1.0 if j < i else 0.0

    ws_excl = jnp.dot(tri, w, preferred_element_type=jnp.float32)        # sum_{j<i} w_j
    wts_excl = jnp.dot(tri, w * t, preferred_element_type=jnp.float32)   # sum_{j<i} w_j t_j

    loss_bi = 2.0 * w * (t * ws_excl - wts_excl)
    loss_uni = (1.0 / 3.0) * w * w * dlt
    dist_ref[...] = lambda_distortion * jnp.sum(loss_bi + loss_uni, axis=0, keepdims=True)


# --------------------------------------------------------------------------------------
# Wrapper glue
# --------------------------------------------------------------------------------------
def _round_up(x, m):
    return ((x + m - 1) // m) * m


def _pad_last(x, target):
    pad = target - x.shape[-1]
    if pad == 0:
        return x
    return jnp.pad(x, [(0, 0)] * (x.ndim - 1) + [(0, pad)])


def _pack_per_ray_transposed(x, starts_r, counts_r, S):
    """Gather flat per-sample values (N,) into a transposed (S, R_pad) slab.

    Row s, column r holds sample s of ray r (zero in padding).  Gather-only:
    no (R, S) float scatter.
    """
    s_ids = jnp.arange(S, dtype=jnp.int32)[:, None]                     # (S, 1)
    idx = jnp.clip(starts_r[None, :] + s_ids, 0, x.shape[0] - 1)        # (S, R_pad)
    vals = jnp.where(s_ids < counts_r[None, :], x[idx], jnp.zeros((), x.dtype))
    return vals.astype(jnp.float32)


def nerf_loss(results, target, *, lambda_opacity=LAMBDA_OPACITY,
              lambda_distortion=LAMBDA_DISTORTION, max_samples=16, tile_r=2048):
    rgb = results['rgb'].astype(jnp.float32)
    tgt = target['rgb'].astype(jnp.float32)
    op = results['opacity'].astype(jnp.float32)
    R = rgb.shape[0]
    S = max_samples

    # Ray-tile size: multiple of 128 (lanes).  Per-tile footprint with S=16 is
    # ~3*S*TILE_R*4 + small, double-buffered -> ~1 MiB at TILE_R=2048: safe on
    # v7x's 64 MiB VMEM and trivially so on v5e/v6e.
    TILE_R = min(tile_r, _round_up(max(R, 1), 128))
    R_pad = _round_up(R, TILE_R)
    grid = (R_pad // TILE_R,)

    # Lane-dense transposed presentation (rays on the 128-lane axis).
    rgb_t = _pad_last(rgb.T, R_pad)   # (3, R_pad)
    tgt_t = _pad_last(tgt.T, R_pad)   # (3, R_pad)
    op_t = _pad_last(op.T, R_pad)     # (1, R_pad)

    cparams = pltpu.CompilerParams(dimension_semantics=("parallel",))

    if lambda_distortion > 0:
        rays_a = results['rays_a'].astype(jnp.int32)
        ray_idx = rays_a[:, 0]
        # Re-order per-ray (start, count) by output ray index (tiny int scatters).
        starts_r = jnp.zeros((R_pad,), jnp.int32).at[ray_idx].set(rays_a[:, 1])
        counts_r = jnp.zeros((R_pad,), jnp.int32).at[ray_idx].set(rays_a[:, 2])

        # TODO(synk): move this flat->per-ray packing into the kernel via
        # PrefetchScalarGridSpec (rays_a in SMEM) + per-ray DMA from HBM
        # (memory_space=pl.ANY) to cut HBM traffic ~2x; here it is gather-only
        # XLA glue (no large scatter).
        w_t = _pack_per_ray_transposed(results['ws'], starts_r, counts_r, S)       # (S, R_pad)
        d_t = _pack_per_ray_transposed(results['deltas'], starts_r, counts_r, S)   # (S, R_pad)
        t_t = _pack_per_ray_transposed(results['ts'], starts_r, counts_r, S)       # (S, R_pad)

        # Strictly-lower-triangular matrix (hoisted; resident across grid steps).
        tri = (jnp.arange(S, dtype=jnp.int32)[:, None]
               > jnp.arange(S, dtype=jnp.int32)[None, :]).astype(jnp.float32)      # (S, S)

        rgb_l_t, op_l_t, dist_t = pl.pallas_call(
            functools.partial(_fused_kernel, lambda_opacity=lambda_opacity,
                              lambda_distortion=lambda_distortion),
            out_shape=(jax.ShapeDtypeStruct((3, R_pad), jnp.float32),
                       jax.ShapeDtypeStruct((1, R_pad), jnp.float32),
                       jax.ShapeDtypeStruct((1, R_pad), jnp.float32)),
            grid=grid,
            in_specs=[pl.BlockSpec((3, TILE_R), lambda i: (0, i)),
                      pl.BlockSpec((3, TILE_R), lambda i: (0, i)),
                      pl.BlockSpec((1, TILE_R), lambda i: (0, i)),
                      pl.BlockSpec((S, TILE_R), lambda i: (0, i)),
                      pl.BlockSpec((S, TILE_R), lambda i: (0, i)),
                      pl.BlockSpec((S, TILE_R), lambda i: (0, i)),
                      pl.BlockSpec((S, S), lambda i: (0, 0))],
            out_specs=(pl.BlockSpec((3, TILE_R), lambda i: (0, i)),
                       pl.BlockSpec((1, TILE_R), lambda i: (0, i)),
                       pl.BlockSpec((1, TILE_R), lambda i: (0, i))),
            compiler_params=cparams,
        )(rgb_t, tgt_t, op_t, w_t, d_t, t_t, tri)

        return {'rgb': rgb_l_t[:, :R].T,          # (R, 3)
                'opacity': op_l_t[:, :R].T,       # (R, 1)
                'distortion': dist_t[0, :R]}      # (R,)

    # lambda_distortion == 0 path: elementwise losses only.
    rgb_l_t, op_l_t = pl.pallas_call(
        functools.partial(_elemwise_kernel, lambda_opacity=lambda_opacity),
        out_shape=(jax.ShapeDtypeStruct((3, R_pad), jnp.float32),
                   jax.ShapeDtypeStruct((1, R_pad), jnp.float32)),
        grid=grid,
        in_specs=[pl.BlockSpec((3, TILE_R), lambda i: (0, i)),
                  pl.BlockSpec((3, TILE_R), lambda i: (0, i)),
                  pl.BlockSpec((1, TILE_R), lambda i: (0, i))],
        out_specs=(pl.BlockSpec((3, TILE_R), lambda i: (0, i)),
                   pl.BlockSpec((1, TILE_R), lambda i: (0, i))),
        compiler_params=cparams,
    )(rgb_t, tgt_t, op_t)
    return {'rgb': rgb_l_t[:, :R].T, 'opacity': op_l_t[:, :R].T}


# --------------------------------------------------------------------------------------
# Independent numpy reference (sanity check)
# --------------------------------------------------------------------------------------
def _ref_distortion_np(ws, deltas, ts, rays_a):
    ws, deltas, ts = (np.asarray(jax.device_get(a)) for a in (ws, deltas, ts))
    rays_a = np.asarray(jax.device_get(rays_a))
    out = np.zeros((rays_a.shape[0],), np.float64)
    for ray_idx, start, n in rays_a:
        w = ws[start:start + n]
        d = deltas[start:start + n]
        t = ts[start:start + n]
        pair = np.sum(w[:, None] * w[None, :] * np.abs(t[:, None] - t[None, :]))
        uni = np.sum(w * w * d) / 3.0
        out[ray_idx] = pair + uni
    return out


# --------------------------------------------------------------------------------------
# Test
# --------------------------------------------------------------------------------------
if __name__ == "__main__":
    key = jax.random.PRNGKey(0)
    R, S = 8, 16  # N_rays, max samples per ray
    k1, k2, k3, k4, k5, k6, k7 = jax.random.split(key, 7)

    # Per-ray sample counts (concrete ints, only used to build the flat test arrays).
    n_samples = np.asarray(jax.device_get(jax.random.randint(k1, (R,), 4, S + 1)),
                           dtype=np.int32)
    starts = np.concatenate([[0], np.cumsum(n_samples)[:-1]]).astype(np.int32)
    N = int(n_samples.sum())
    rays_a = jnp.asarray(np.stack([np.arange(R, dtype=np.int32), starts, n_samples], axis=1),
                         dtype=jnp.int32)

    ws = jax.random.uniform(k2, (N,), jnp.float32, 0.0, 1.0)
    deltas = jax.random.uniform(k3, (N,), jnp.float32, 0.01, 0.1)
    # ts: sorted midpoints within each ray
    t_raw = np.asarray(jax.device_get(jax.random.uniform(k4, (N,), jnp.float32, 0.1, 4.0)))
    ts_np = np.empty_like(t_raw)
    off = 0
    for n in n_samples.tolist():
        ts_np[off:off + n] = np.sort(t_raw[off:off + n])
        off += n
    ts = jnp.asarray(ts_np)

    results = {
        'rgb': jax.random.uniform(k5, (R, 3), jnp.float32),
        'opacity': jax.random.uniform(k6, (R, 1), jnp.float32, 0.05, 0.95),
        'ws': ws, 'deltas': deltas, 'ts': ts, 'rays_a': rays_a,
    }
    target = {'rgb': jax.random.uniform(k7, (R, 3), jnp.float32)}

    out = nerf_loss(results, target, max_samples=S)
    out = jax.block_until_ready(out)

    # Reference check
    rgb_ref = (np.asarray(results['rgb']) - np.asarray(target['rgb'])) ** 2
    o_ref = np.asarray(results['opacity']) + 1e-10
    op_ref = LAMBDA_OPACITY * (-o_ref * np.log(o_ref))
    dist_ref = LAMBDA_DISTORTION * _ref_distortion_np(ws, deltas, ts, rays_a)

    np.testing.assert_allclose(np.asarray(out['rgb']), rgb_ref, rtol=1e-4, atol=1e-6)
    np.testing.assert_allclose(np.asarray(out['opacity']), op_ref, rtol=1e-4, atol=1e-6)
    np.testing.assert_allclose(np.asarray(out['distortion']), dist_ref, rtol=1e-3, atol=1e-6)

    print("KERNEL_OK")
</pallas_src>

<mosaic_0001>
module attributes {stable_mosaic.version = 11 : i64} {
  func.func @_fused_kernel(%arg0: i32, %arg1: memref<3x128xf32, #tpu.memory_space<vmem>>, %arg2: memref<3x128xf32, #tpu.memory_space<vmem>>, %arg3: memref<1x128xf32, #tpu.memory_space<vmem>>, %arg4: memref<16x128xf32, #tpu.memory_space<vmem>>, %arg5: memref<16x128xf32, #tpu.memory_space<vmem>>, %arg6: memref<16x128xf32, #tpu.memory_space<vmem>>, %arg7: memref<16x16xf32, #tpu.memory_space<vmem>>, %arg8: memref<3x128xf32, #tpu.memory_space<vmem>>, %arg9: memref<1x128xf32, #tpu.memory_space<vmem>>, %arg10: memref<1x128xf32, #tpu.memory_space<vmem>>) attributes {dimension_semantics = [#tpu.dimension_semantics<parallel>], iteration_bounds = array<i64: 1>, scalar_prefetch = 0 : i64, scratch_operands = 0 : i64, tpu.core_type = #tpu.core_type<tc>, window_params = [{transform_indices = @transform_0, window_bounds = array<i64: 3, 128>}, {transform_indices = @transform_1, window_bounds = array<i64: 3, 128>}, {transform_indices = @transform_2, window_bounds = array<i64: 1, 128>}, {transform_indices = @transform_3, window_bounds = array<i64: 16, 128>}, {transform_indices = @transform_4, window_bounds = array<i64: 16, 128>}, {transform_indices = @transform_5, window_bounds = array<i64: 16, 128>}, {pipeline_mode = #tpu.pipeline_mode<synchronous>, transform_indices = @transform_6, window_bounds = array<i64: 16, 16>}, {transform_indices = @transform_7, window_bounds = array<i64: 3, 128>}, {transform_indices = @transform_8, window_bounds = array<i64: 1, 128>}, {transform_indices = @transform_9, window_bounds = array<i64: 1, 128>}]} {
    %c0 = arith.constant 0 : index
    %c0_0 = arith.constant 0 : index
    %0 = vector.load %arg1[%c0, %c0_0] : memref<3x128xf32, #tpu.memory_space<vmem>>, vector<3x128xf32>
    %c0_1 = arith.constant 0 : index
    %c0_2 = arith.constant 0 : index
    %1 = vector.load %arg2[%c0_1, %c0_2] : memref<3x128xf32, #tpu.memory_space<vmem>>, vector<3x128xf32>
    %2 = arith.subf %0, %1 : vector<3x128xf32>
    %3 = arith.mulf %2, %2 : vector<3x128xf32>
    %c0_3 = arith.constant 0 : index
    %c0_4 = arith.constant 0 : index
    %4 = vector.load %arg8[%c0_3, %c0_4] : memref<3x128xf32, #tpu.memory_space<vmem>>, vector<3x128xf32>
    tpu.vector_store %arg8[%c0_3, %c0_4], %3 {strides = array<i32>} : memref<3x128xf32, #tpu.memory_space<vmem>>, vector<3x128xf32>,
    %c0_5 = arith.constant 0 : index
    %c0_6 = arith.constant 0 : index
    %5 = vector.load %arg3[%c0_5, %c0_6] : memref<1x128xf32, #tpu.memory_space<vmem>>, vector<1x128xf32>
    %cst = arith.constant 1.000000e-10 : f32
    %6 = vector.broadcast %cst : f32 to vector<1x128xf32>
    %7 = arith.addf %5, %6 : vector<1x128xf32>
    %cst_7 = arith.constant 0.000000e+00 : f32
    %8 = vector.broadcast %cst_7 : f32 to vector<1x128xf32>
    %9 = arith.subf %8, %7 : vector<1x128xf32>
    %10 = math.log %7 : vector<1x128xf32>
    %11 = arith.mulf %9, %10 : vector<1x128xf32>
    %cst_8 = arith.constant 1.000000e-03 : f32
    %12 = vector.broadcast %cst_8 : f32 to vector<1x128xf32>
    %13 = arith.mulf %12, %11 : vector<1x128xf32>
    %c0_9 = arith.constant 0 : index
    %c0_10 = arith.constant 0 : index
    %14 = vector.load %arg9[%c0_9, %c0_10] : memref<1x128xf32, #tpu.memory_space<vmem>>, vector<1x128xf32>
    tpu.vector_store %arg9[%c0_9, %c0_10], %13 {strides = array<i32>} : memref<1x128xf32, #tpu.memory_space<vmem>>, vector<1x128xf32>,
    %c0_11 = arith.constant 0 : index
    %c0_12 = arith.constant 0 : index
    %15 = vector.load %arg4[%c0_11, %c0_12] : memref<16x128xf32, #tpu.memory_space<vmem>>, vector<16x128xf32>
    %c0_13 = arith.constant 0 : index
    %c0_14 = arith.constant 0 : index
    %16 = vector.load %arg5[%c0_13, %c0_14] : memref<16x128xf32, #tpu.memory_space<vmem>>, vector<16x128xf32>
    %c0_15 = arith.constant 0 : index
    %c0_16 = arith.constant 0 : index
    %17 = vector.load %arg6[%c0_15, %c0_16] : memref<16x128xf32, #tpu.memory_space<vmem>>, vector<16x128xf32>
    %c0_17 = arith.constant 0 : index
    %c0_18 = arith.constant 0 : index
    %18 = vector.load %arg7[%c0_17, %c0_18] : memref<16x16xf32, #tpu.memory_space<vmem>>, vector<16x16xf32>
    %cst_19 = arith.constant dense<0.000000e+00> : vector<16x128xf32>
    %19 = tpu.matmul %18, %15, %cst_19 {dimension_numbers = #tpu.dot_dimension_numbers<[1], [0], [0], [1], [0, 0, 1, 1], [], []>} : vector<16x16xf32>, vector<16x128xf32>, vector<16x128xf32> -> vector<16x128xf32>
    %20 = arith.mulf %15, %17 : vector<16x128xf32>
    %cst_20 = arith.constant dense<0.000000e+00> : vector<16x128xf32>
    %21 = tpu.matmul %18, %20, %cst_20 {dimension_numbers = #tpu.dot_dimension_numbers<[1], [0], [0], [1], [0, 0, 1, 1], [], []>} : vector<16x16xf32>, vector<16x128xf32>, vector<16x128xf32> -> vector<16x128xf32>
    %cst_21 = arith.constant 2.000000e+00 : f32
    %22 = vector.broadcast %cst_21 : f32 to vector<16x128xf32>
    %23 = arith.mulf %22, %15 : vector<16x128xf32>
    %24 = arith.mulf %17, %19 : vector<16x128xf32>
    %25 = arith.subf %24, %21 : vector<16x128xf32>
    %26 = arith.mulf %23, %25 : vector<16x128xf32>
    %cst_22 = arith.constant 0.333333343 : f32
    %27 = vector.broadcast %cst_22 : f32 to vector<16x128xf32>
    %28 = arith.mulf %27, %15 : vector<16x128xf32>
    %29 = arith.mulf %28, %15 : vector<16x128xf32>
    %30 = arith.mulf %29, %16 : vector<16x128xf32>
    %31 = arith.addf %26, %30 : vector<16x128xf32>
    %cst_23 = arith.constant dense<0.000000e+00> : vector<128xf32>
    %32 = vector.multi_reduction <add>, %31, %cst_23 [0] : vector<16x128xf32> to vector<128xf32>
    %33 = vector.shape_cast %32 : vector<128xf32> to vector<1x128xf32>
    %cst_24 = arith.constant 1.000000e-03 : f32
    %34 = vector.broadcast %cst_24 : f32 to vector<1x128xf32>
    %35 = arith.mulf %34, %33 : vector<1x128xf32>
    %c0_25 = arith.constant 0 : index
    %c0_26 = arith.constant 0 : index
    %36 = vector.load %arg10[%c0_25, %c0_26] : memref<1x128xf32, #tpu.memory_space<vmem>>, vector<1x128xf32>
    tpu.vector_store %arg10[%c0_25, %c0_26], %35 {strides = array<i32>} : memref<1x128xf32, #tpu.memory_space<vmem>>, vector<1x128xf32>,
    return
  }
  func.func @transform_0(%arg0: i32) -> (i32, i32) {
    %c0_i32 = arith.constant 0 : i32
    %c0_i32_0 = arith.constant 0 : i32
    return %c0_i32, %arg0 : i32, i32
  }
  func.func @transform_1(%arg0: i32) -> (i32, i32) {
    %c0_i32 = arith.constant 0 : i32
    %c0_i32_0 = arith.constant 0 : i32
    return %c0_i32, %arg0 : i32, i32
  }
  func.func @transform_2(%arg0: i32) -> (i32, i32) {
    %c0_i32 = arith.constant 0 : i32
    %c0_i32_0 = arith.constant 0 : i32
    return %c0_i32, %arg0 : i32, i32
  }
  func.func @transform_3(%arg0: i32) -> (i32, i32) {
    %c0_i32 = arith.constant 0 : i32
    %c0_i32_0 = arith.constant 0 : i32
    return %c0_i32, %arg0 : i32, i32
  }
  func.func @transform_4(%arg0: i32) -> (i32, i32) {
    %c0_i32 = arith.constant 0 : i32
    %c0_i32_0 = arith.constant 0 : i32
    return %c0_i32, %arg0 : i32, i32
  }
  func.func @transform_5(%arg0: i32) -> (i32, i32) {
    %c0_i32 = arith.constant 0 : i32
    %c0_i32_0 = arith.constant 0 : i32
    return %c0_i32, %arg0 : i32, i32
  }
  func.func @transform_6(%arg0: i32) -> (i32, i32) {
    %c0_i32 = arith.constant 0 : i32
    %c0_i32_0 = arith.constant 0 : i32
    %c0_i32_1 = arith.constant 0 : i32
    return %c0_i32, %c0_i32_0 : i32, i32
  }
  func.func @transform_7(%arg0: i32) -> (i32, i32) {
    %c0_i32 = arith.constant 0 : i32
    %c0_i32_0 = arith.constant 0 : i32
    return %c0_i32, %arg0 : i32, i32
  }
  func.func @transform_8(%arg0: i32) -> (i32, i32) {
    %c0_i32 = arith.constant 0 : i32
    %c0_i32_0 = arith.constant 0 : i32
    return %c0_i32, %arg0 : i32, i32
  }
  func.func @transform_9(%arg0: i32) -> (i32, i32) {
    %c0_i32 = arith.constant 0 : i32
    %c0_i32_0 = arith.constant 0 : i32
    return %c0_i32, %arg0 : i32, i32
  }
}

</mosaic_0001>

<llo_original>
// kernel: tpu_custom_call.1
$region0: #{tpu_custom_call.1}
  #allocation0 [shape = 'u32[]', space=smem, size = 0x4, offset = 0x4, fixed_abs, tag = 'smem constant byte address 0x4 - core index']
  #allocation1 [shape = 'u32[144,128]{1,0:T(1,128)}', space=vmem, size = 0x12000, scoped, tag = 'internal scratch']
  %s0 = inlined_call_operand.hbm [shape: f32[3,128], index: 0, kind: input, shape index: {}]
  %s1 = inlined_call_operand.hbm [shape: f32[3,128], index: 1, kind: input, shape index: {}]
  %s2 = inlined_call_operand.vmem [shape: f32[1,128], index: 2, kind: input, shape index: {}]
  %s3 = inlined_call_operand.hbm [shape: f32[16,128], index: 3, kind: input, shape index: {}]
  %s4 = inlined_call_operand.hbm [shape: f32[16,128], index: 4, kind: input, shape index: {}]
  %s5 = inlined_call_operand.hbm [shape: f32[16,128], index: 5, kind: input, shape index: {}]
  %s6 = inlined_call_operand.hbm [shape: f32[16,16], index: 6, kind: input, shape index: {}]
  %s7 = inlined_call_operand.hbm [shape: f32[3,128], index: 7, kind: output, shape index: {0}]
  %s8 = inlined_call_operand.hbm [shape: f32[1,128], index: 8, kind: output, shape index: {1}]
  %s9 = inlined_call_operand.hbm [shape: f32[1,128], index: 9, kind: output, shape index: {2}]
  %10 = xla_tuple %s7, %s8, %s9
  %s11 = sld [smem:[#allocation0]]
  $region78: #{tpu_custom_call.1} parent=0
    _
  %s13 = ssub.s32 1, %s11
  %s14 = scalar_select 0, %s13, %s11
  $region1: #{tpu_custom_call.1} parent=0
    #allocation2 [shape = 'u8[2048]{0}', space=vmem, size = 0x800, scoped, tag = 'input window, operand 0, single buffered']
    #allocation3 [shape = 's32[1]{0}', space=sflag, size = 0x4, scoped, tag = 'scoped memory for tpu_custom_call.1']
    #allocation4 [shape = 's32[1]{0}', space=sflag, size = 0x4, scoped, tag = 'scoped memory for tpu_custom_call.1']
    #allocation5 [shape = 'u8[2048]{0}', space=vmem, size = 0x800, scoped, tag = 'input window, operand 1, single buffered']
    #allocation6 [shape = 's32[1]{0}', space=sflag, size = 0x4, scoped, tag = 'scoped memory for tpu_custom_call.1']
    #allocation7 [shape = 'u8[8192]{0}', space=vmem, size = 0x2000, scoped, tag = 'input window, operand 3, single buffered']
    #allocation8 [shape = 'u8[8192]{0}', space=vmem, size = 0x2000, scoped, tag = 'input window, operand 4, single buffered']
    #allocation9 [shape = 's32[1]{0}', space=sflag, size = 0x4, scoped, tag = 'scoped memory for tpu_custom_call.1']
    #allocation10 [shape = 'u8[8192]{0}', space=vmem, size = 0x2000, scoped, tag = 'input window, operand 5, single buffered']
    #allocation11 [shape = 'u8[8192]{0}', space=vmem, size = 0x2000, scoped, tag = 'input window, operand 6, single buffered']
    #allocation12 [shape = 's32[1]{0}', space=sflag, size = 0x4, scoped, tag = 'scoped memory for tpu_custom_call.1']
    #allocation13 [shape = 'u8[2048]{0}', space=vmem, size = 0x800, scoped, tag = 'output window, operand 0, single buffered']
    #allocation14 [shape = 'u8[512]{0}', space=vmem, size = 0x400, scoped, tag = 'output window, operand 1, single buffered']
    #allocation15 [shape = 's32[1]{0}', space=sflag, size = 0x4, scoped, tag = 'scoped memory for tpu_custom_call.1']
    #allocation16 [shape = 'u8[512]{0}', space=vmem, size = 0x400, scoped, tag = 'output window, operand 2, single buffered']
    %15 = vsyncpa [#allocation3], 0
    %16 = vsyncpa [#allocation6], 0
    %17 = vsyncpa [#allocation9], 0
    %18 = vsyncpa [#allocation12], 0
    %19 = vsyncpa [#allocation4], 0
    %20 = vsyncpa [#allocation15], 0
    // Predicated region
    $region2: #{tpu_custom_call.1} parent=1 // pred_check
      _
    $region3: #{tpu_custom_call.1} parent=1 // pred_check_branch
      %22 = sbr.rel (0) target = $region5
    $region4: #{tpu_custom_call.1} parent=1 // pred_region
      %s24 = ssub.s32 64, 64
      %25 = vsyncadd [#allocation3], %s24
      %s27 = sshll.u32 [#allocation2], 4
      %s28 = int_to_ptr.vmem [resolvable:$true] %s27
      %30 = dma.hbm_to_vmem [thread:$0]  %s0, 64, %s28, [#allocation3]
    $region5: #{tpu_custom_call.1} parent=1 // pred_fallthru
      _
    // Predicated region
    $region6: #{tpu_custom_call.1} parent=1 // pred_check
      _
    $region7: #{tpu_custom_call.1} parent=1 // pred_check_branch
      %32 = sbr.rel (0) target = $region9
    $region8: #{tpu_custom_call.1} parent=1 // pred_region
      %s34 = ssub.s32 64, 64
      %35 = vsyncadd [#allocation6], %s34
      %s37 = sshll.u32 [#allocation5], 4
      %s38 = int_to_ptr.vmem [resolvable:$true] %s37
      %40 = dma.hbm_to_vmem [thread:$0]  %s1, 64, %s38, [#allocation6]
    $region9: #{tpu_custom_call.1} parent=1 // pred_fallthru
      _
    // Predicated region
    $region10: #{tpu_custom_call.1} parent=1 // pred_check
      _
    $region11: #{tpu_custom_call.1} parent=1 // pred_check_branch
      %42 = sbr.rel (0) target = $region13
    $region12: #{tpu_custom_call.1} parent=1 // pred_region
      _
    $region13: #{tpu_custom_call.1} parent=1 // pred_fallthru
      _
    // Predicated region
    $region14: #{tpu_custom_call.1} parent=1 // pred_check
      _
    $region15: #{tpu_custom_call.1} parent=1 // pred_check_branch
      %44 = sbr.rel (0) target = $region17
    $region16: #{tpu_custom_call.1} parent=1 // pred_region
      %s46 = ssub.s32 256, 256
      %47 = vsyncadd [#allocation6], %s46
      %s48 = sshll.u32 [#allocation7], 4
      %s49 = int_to_ptr.vmem [resolvable:$true] %s48
      %54 = dma.hbm_to_vmem [thread:$0]  %s3, 256, %s49, [#allocation6], 128, 128, 8
    $region17: #{tpu_custom_call.1} parent=1 // pred_fallthru
      _
    // Predicated region
    $region18: #{tpu_custom_call.1} parent=1 // pred_check
      _
    $region19: #{tpu_custom_call.1} parent=1 // pred_check_branch
      %56 = sbr.rel (0) target = $region21
    $region20: #{tpu_custom_call.1} parent=1 // pred_region
      %s58 = ssub.s32 256, 256
      %59 = vsyncadd [#allocation9], %s58
      %s60 = sshll.u32 [#allocation8], 4
      %s61 = int_to_ptr.vmem [resolvable:$true] %s60
      %66 = dma.hbm_to_vmem [thread:$0]  %s4, 256, %s61, [#allocation9], 128, 128, 8
    $region21: #{tpu_custom_call.1} parent=1 // pred_fallthru
      _
    // Predicated region
    $region22: #{tpu_custom_call.1} parent=1 // pred_check
      _
    $region23: #{tpu_custom_call.1} parent=1 // pred_check_branch
      %68 = sbr.rel (0) target = $region25
    $region24: #{tpu_custom_call.1} parent=1 // pred_region
      %s70 = ssub.s32 256, 256
      %71 = vsyncadd [#allocation9], %s70
      %s72 = sshll.u32 [#allocation10], 4
      %s73 = int_to_ptr.vmem [resolvable:$true] %s72
      %78 = dma.hbm_to_vmem [thread:$0]  %s5, 256, %s73, [#allocation9], 128, 128, 8
    $region25: #{tpu_custom_call.1} parent=1 // pred_fallthru
      _
    // Predicated region
    $region26: #{tpu_custom_call.1} parent=1 // pred_check
      _
    $region27: #{tpu_custom_call.1} parent=1 // pred_check_branch
      %80 = sbr.rel (0) target = $region29
    $region28: #{tpu_custom_call.1} parent=1 // pred_region
      %s82 = ssub.s32 256, 256
      %83 = vsyncadd [#allocation12], %s82
      %s84 = sshll.u32 [#allocation11], 4
      %s85 = int_to_ptr.vmem [resolvable:$true] %s84
      %90 = dma.hbm_to_vmem [thread:$0]  %s6, 256, %s85, [#allocation12], 128, 128, 8
    $region29: #{tpu_custom_call.1} parent=1 // pred_fallthru
      _
    // Predicated region
    $region30: #{tpu_custom_call.1} parent=1 // pred_check
      _
    $region31: #{tpu_custom_call.1} parent=1 // pred_check_branch
      %92 = sbr.rel (0) target = $region33
    $region32: #{tpu_custom_call.1} parent=1 // pred_region
      %93 = dma.done [#allocation3], 64
    $region33: #{tpu_custom_call.1} parent=1 // pred_fallthru
      _
    // Predicated region
    $region34: #{tpu_custom_call.1} parent=1 // pred_check
      _
    $region35: #{tpu_custom_call.1} parent=1 // pred_check_branch
      %95 = sbr.rel (0) target = $region37
    $region36: #{tpu_custom_call.1} parent=1 // pred_region
      %96 = dma.done [#allocation6], 64
    $region37: #{tpu_custom_call.1} parent=1 // pred_fallthru
      _
    // Predicated region
    $region38: #{tpu_custom_call.1} parent=1 // pred_check
      _
    $region39: #{tpu_custom_call.1} parent=1 // pred_check_branch
      %98 = sbr.rel (0) target = $region41
    $region40: #{tpu_custom_call.1} parent=1 // pred_region
      %99 = dma.done [#allocation6], 256
    $region41: #{tpu_custom_call.1} parent=1 // pred_fallthru
      _
    // Predicated region
    $region42: #{tpu_custom_call.1} parent=1 // pred_check
      _
    $region43: #{tpu_custom_call.1} parent=1 // pred_check_branch
      %101 = sbr.rel (0) target = $region45
    $region44: #{tpu_custom_call.1} parent=1 // pred_region
      %102 = dma.done [#allocation9], 256
    $region45: #{tpu_custom_call.1} parent=1 // pred_fallthru
      _
    // Predicated region
    $region46: #{tpu_custom_call.1} parent=1 // pred_check
      _
    $region47: #{tpu_custom_call.1} parent=1 // pred_check_branch
      %104 = sbr.rel (0) target = $region49
    $region48: #{tpu_custom_call.1} parent=1 // pred_region
      %105 = dma.done [#allocation9], 256
    $region49: #{tpu_custom_call.1} parent=1 // pred_fallthru
      _
    // Predicated region
    $region50: #{tpu_custom_call.1} parent=1 // pred_check
      _
    $region51: #{tpu_custom_call.1} parent=1 // pred_check_branch
      %107 = sbr.rel (0) target = $region53
    $region52: #{tpu_custom_call.1} parent=1 // pred_region
      %108 = dma.done [#allocation12], 256
    $region53: #{tpu_custom_call.1} parent=1 // pred_fallthru
      _
    %v109 = vld [vmem:[#allocation2] sm:$0x7]
    %v110 = vld [vmem:[#allocation5] sm:$0x7]
    %v111 = vsub.f32 %v109, %v110
    %v112 = vmul.f32 %v111, %v111
    %113 = vst [vmem:[#allocation13] sm:$0x7] %v112
    %v114 = vld [vmem:[%s2] sm:$0x1]
    %v115 = vadd.f32 %v114, 1e-10
    %v116 = vsub.f32 0.0, %v115
    %v117 = vlog2.pop %v115
    %v118 = vmul.f32 %v117, 0.6931472
    %v119 = vmul.f32 %v116, %v118
    %v120 = vmul.f32 %v119, 0.001
    %121 = vst [vmem:[#allocation14] sm:$0x1] %v120
    %v122 = vld [vmem:[#allocation7] sm:$0xff]
    %v123 = vld [vmem:[#allocation7 + $0x8] sm:$0xff]
    %v124 = vld [vmem:[#allocation8] sm:$0xff]
    %v125 = vld [vmem:[#allocation8 + $0x8] sm:$0xff]
    %v126 = vld [vmem:[#allocation10] sm:$0xff]
    %v127 = vld [vmem:[#allocation10 + $0x8] sm:$0xff]
    %v128 = vld [vmem:[#allocation11] sm:$0xff]
    %v129 = vld [vmem:[#allocation11 + $0x8] sm:$0xff]
    %vm130 = vcmask 130048
    %v132 = vsel %vm130, %v128, 0
    %v135 = vsel %vm130, %v129, 0
    %137 = vmatprep.subr.mxu0 0.0
    %138 = vmatpush1.msra.mxu0 0.0
    %139 = vmatprep.subr.mxu0 0.0
    %140 = vmatpush1.msra.mxu0 0.0
    %141 = vmatprep.subr.mxu0 0.0
    %142 = vmatpush1.msra.mxu0 0.0
    %143 = vmatprep.subr.mxu0 0.0
    %144 = vmatpush1.msra.mxu0 0.0
    %145 = vmatprep.subr.mxu0 0.0
    %146 = vmatpush1.msra.mxu0 0.0
    %147 = vmatprep.subr.mxu0 0.0
    %148 = vmatpush1.msra.mxu0 0.0
    %149 = vmatprep.subr.mxu0 0.0
    %150 = vmatpush1.msra.mxu0 0.0
    %151 = vmatprep.subr.mxu0 0.0
    %152 = vmatpush1.msra.mxu0 0.0
    %153 = vmatprep.subr.mxu0 0.0
    %154 = vmatpush1.msra.mxu0 0.0
    %155 = vmatprep.subr.mxu0 0.0
    %156 = vmatpush1.msra.mxu0 0.0
    %157 = vmatprep.subr.mxu0 0.0
    %158 = vmatpush1.msra.mxu0 0.0
    %159 = vmatprep.subr.mxu0 0.0
    %160 = vmatpush1.msra.mxu0 0.0
    %161 = vmatprep.subr.mxu0 0.0
    %162 = vmatpush1.msra.mxu0 0.0
    %163 = vmatprep.subr.mxu0 0.0
    %164 = vmatpush1.msra.mxu0 0.0
    %165 = vmatprep.subr.mxu0 0.0
    %166 = vmatpush1.msra.mxu0 %v123
    %167 = vmatprep.subr.mxu0 0.0
    %168 = vmatpush1.msra.mxu0 %v122
    %169 = vmatprep.subr.mxu0 0.0
    %170 = vmatpush2.msra.mxu0 0.0
    %171 = vmatprep.subr.mxu0 0.0
    %172 = vmatpush2.msra.mxu0 0.0
    %173 = vmatprep.subr.mxu0 0.0
    %174 = vmatpush2.msra.mxu0 0.0
    %175 = vmatprep.subr.mxu0 0.0
    %176 = vmatpush2.msra.mxu0 0.0
    %177 = vmatprep.subr.mxu0 0.0
    %178 = vmatpush2.msra.mxu0 0.0
    %179 = vmatprep.subr.mxu0 0.0
    %180 = vmatpush2.msra.mxu0 0.0
    %181 = vmatprep.subr.mxu0 0.0
    %182 = vmatpush2.msra.mxu0 0.0
    %183 = vmatprep.subr.mxu0 0.0
    %184 = vmatpush2.msra.mxu0 0.0
    %185 = vmatprep.subr.mxu0 0.0
    %186 = vmatpush2.msra.mxu0 0.0
    %187 = vmatprep.subr.mxu0 0.0
    %188 = vmatpush2.msra.mxu0 0.0
    %189 = vmatprep.subr.mxu0 0.0
    %190 = vmatpush2.msra.mxu0 0.0
    %191 = vmatprep.subr.mxu0 0.0
    %192 = vmatpush2.msra.mxu0 0.0
    %193 = vmatprep.subr.mxu0 0.0
    %194 = vmatpush2.msra.mxu0 0.0
    %195 = vmatprep.subr.mxu0 0.0
    %196 = vmatpush2.msra.mxu0 0.0
    %197 = vmatprep.subr.mxu0 0.0
    %198 = vmatpush2.msra.mxu0 0.0
    %199 = vmatprep.subr.mxu0 0.0
    %200 = vmatpush2.msra.mxu0 0.0
    %201 = vmatprep.mubr.f32.mxu0 0.0
    %202 = vmatmul.mubr.f32.gmra.mxu0 %v132
    %v203 = vpop.f32.mrf.mxu0
    %v204 = vadd.f32 0.0, %v203
    %v205 = vpop.f32.mrf.mxu0
    %206 = vmatprep.mubr.f32.mxu0 0.0
    %207 = vmatmul.mubr.f32.gmra.mxu0 %v135
    %v208 = vpop.f32.mrf.mxu0
    %v209 = vadd.f32 0.0, %v208
    %v210 = vpop.f32.mrf.mxu0
    %211 = vdwg.mxu0
    %v212 = vmul.f32 %v122, %v126
    %v213 = vmul.f32 %v123, %v127
    %214 = vmatprep.subr.mxu0 0.0
    %215 = vmatpush1.msra.mxu0 0.0
    %216 = vmatprep.subr.mxu0 0.0
    %217 = vmatpush1.msra.mxu0 0.0
    %218 = vmatprep.subr.mxu0 0.0
    %219 = vmatpush1.msra.mxu0 0.0
    %220 = vmatprep.subr.mxu0 0.0
    %221 = vmatpush1.msra.mxu0 0.0
    %222 = vmatprep.subr.mxu0 0.0
    %223 = vmatpush1.msra.mxu0 0.0
    %224 = vmatprep.subr.mxu0 0.0
    %225 = vmatpush1.msra.mxu0 0.0
    %226 = vmatprep.subr.mxu0 0.0
    %227 = vmatpush1.msra.mxu0 0.0
    %228 = vmatprep.subr.mxu0 0.0
    %229 = vmatpush1.msra.mxu0 0.0
    %230 = vmatprep.subr.mxu0 0.0
    %231 = vmatpush1.msra.mxu0 0.0
    %232 = vmatprep.subr.mxu0 0.0
    %233 = vmatpush1.msra.mxu0 0.0
    %234 = vmatprep.subr.mxu0 0.0
    %235 = vmatpush1.msra.mxu0 0.0
    %236 = vmatprep.subr.mxu0 0.0
    %237 = vmatpush1.msra.mxu0 0.0
    %238 = vmatprep.subr.mxu0 0.0
    %239 = vmatpush1.msra.mxu0 0.0
    %240 = vmatprep.subr.mxu0 0.0
    %241 = vmatpush1.msra.mxu0 0.0
    %242 = vmatprep.subr.mxu0 0.0
    %243 = vmatpush1.msra.mxu0 %v213
    %244 = vmatprep.subr.mxu0 0.0
    %245 = vmatpush1.msra.mxu0 %v212
    %246 = vmatprep.subr.mxu0 0.0
    %247 = vmatpush2.msra.mxu0 0.0
    %248 = vmatprep.subr.mxu0 0.0
    %249 = vmatpush2.msra.mxu0 0.0
    %250 = vmatprep.subr.mxu0 0.0
    %251 = vmatpush2.msra.mxu0 0.0
    %252 = vmatprep.subr.mxu0 0.0
    %253 = vmatpush2.msra.mxu0 0.0
    %254 = vmatprep.subr.mxu0 0.0
    %255 = vmatpush2.msra.mxu0 0.0
    %256 = vmatprep.subr.mxu0 0.0
    %257 = vmatpush2.msra.mxu0 0.0
    %258 = vmatprep.subr.mxu0 0.0
    %259 = vmatpush2.msra.mxu0 0.0
    %260 = vmatprep.subr.mxu0 0.0
    %261 = vmatpush2.msra.mxu0 0.0
    %262 = vmatprep.subr.mxu0 0.0
    %263 = vmatpush2.msra.mxu0 0.0
    %264 = vmatprep.subr.mxu0 0.0
    %265 = vmatpush2.msra.mxu0 0.0
    %266 = vmatprep.subr.mxu0 0.0
    %267 = vmatpush2.msra.mxu0 0.0
    %268 = vmatprep.subr.mxu0 0.0
    %269 = vmatpush2.msra.mxu0 0.0
    %270 = vmatprep.subr.mxu0 0.0
    %271 = vmatpush2.msra.mxu0 0.0
    %272 = vmatprep.subr.mxu0 0.0
    %273 = vmatpush2.msra.mxu0 0.0
    %274 = vmatprep.subr.mxu0 0.0
    %275 = vmatpush2.msra.mxu0 0.0
    %276 = vmatprep.subr.mxu0 0.0
    %277 = vmatpush2.msra.mxu0 0.0
    %278 = vmatprep.mubr.f32.mxu0 0.0
    %279 = vmatmul.mubr.f32.gmra.mxu0 %v132
    %v280 = vpop.f32.mrf.mxu0
    %v281 = vadd.f32 0.0, %v280
    %v282 = vpop.f32.mrf.mxu0
    %283 = vmatprep.mubr.f32.mxu0 0.0
    %284 = vmatmul.mubr.f32.gmra.mxu0 %v135
    %v285 = vpop.f32.mrf.mxu0
    %v286 = vadd.f32 0.0, %v285
    %v287 = vpop.f32.mrf.mxu0
    %288 = vdwg.mxu0
    %v289 = vmul.f32 %v122, 2.0
    %v290 = vmul.f32 %v123, 2.0
    %v291 = vmul.f32 %v126, %v204
    %v292 = vmul.f32 %v127, %v209
    %v293 = vsub.f32 %v291, %v281
    %v294 = vsub.f32 %v292, %v286
    %v295 = vmul.f32 %v289, %v293
    %v296 = vmul.f32 %v290, %v294
    %v297 = vmul.f32 %v122, 0.33333334
    %v298 = vmul.f32 %v123, 0.33333334
    %v299 = vmul.f32 %v297, %v122
    %v300 = vmul.f32 %v298, %v123
    %v301 = vmul.f32 %v299, %v124
    %v302 = vmul.f32 %v300, %v125
    %v303 = vadd.f32 %v295, %v301
    %v304 = vadd.f32 %v296, %v302
    %v305 = vadd.f32 %v303, %v304
    %v306 = vrot.slane %v305, 4
    %v307 = vadd.f32 %v305, %v306
    %v308 = vrot.slane %v307, 2
    %v309 = vadd.f32 %v307, %v308
    %v310 = vrot.slane %v309, 1
    %v311 = vadd.f32 %v309, %v310
    %v312 = vmul.f32 %v311, 0.001
    %313 = vst [vmem:[#allocation16] sm:$0x1] %v312
    // Predicated region
    $region54: #{tpu_custom_call.1} parent=1 // pred_check
      _
    $region55: #{tpu_custom_call.1} parent=1 // pred_check_branch
      %315 = sbr.rel (0) target = $region57
    $region56: #{tpu_custom_call.1} parent=1 // pred_region
      %s317 = ssub.s32 64, 64
      %318 = vsyncadd [#allocation4], %s317
      %s320 = sshll.u32 [#allocation13], 4
      %s321 = int_to_ptr.vmem [resolvable:$true] %s320
      %323 = dma.vmem_to_hbm [thread:$0]  %s321, 64, %s7, [#allocation4]
    $region57: #{tpu_custom_call.1} parent=1 // pred_fallthru
      _
    // Predicated region
    $region58: #{tpu_custom_call.1} parent=1 // pred_check
      _
    $region59: #{tpu_custom_call.1} parent=1 // pred_check_branch
      %325 = sbr.rel (0) target = $region61
    $region60: #{tpu_custom_call.1} parent=1 // pred_region
      %s327 = ssub.s32 16, 16
      %328 = vsyncadd [#allocation15], %s327
      %s330 = sshll.u32 [#allocation14], 4
      %s331 = int_to_ptr.vmem [resolvable:$true] %s330
      %333 = dma.vmem_to_hbm [thread:$0]  %s331, 16, %s8, [#allocation15]
    $region61: #{tpu_custom_call.1} parent=1 // pred_fallthru
      _
    // Predicated region
    $region62: #{tpu_custom_call.1} parent=1 // pred_check
      _
    $region63: #{tpu_custom_call.1} parent=1 // pred_check_branch
      %335 = sbr.rel (0) target = $region65
    $region64: #{tpu_custom_call.1} parent=1 // pred_region
      %s337 = ssub.s32 16, 16
      %338 = vsyncadd [#allocation15], %s337
      %s340 = sshll.u32 [#allocation16], 4
      %s341 = int_to_ptr.vmem [resolvable:$true] %s340
      %343 = dma.vmem_to_hbm [thread:$0]  %s341, 16, %s9, [#allocation15]
    $region65: #{tpu_custom_call.1} parent=1 // pred_fallthru
      _
    // Predicated region
    $region66: #{tpu_custom_call.1} parent=1 // pred_check
      _
    $region67: #{tpu_custom_call.1} parent=1 // pred_check_branch
      %345 = sbr.rel (0) target = $region69
    $region68: #{tpu_custom_call.1} parent=1 // pred_region
      %346 = dma.done [#allocation4], 64
    $region69: #{tpu_custom_call.1} parent=1 // pred_fallthru
      _
    // Predicated region
    $region70: #{tpu_custom_call.1} parent=1 // pred_check
      _
    $region71: #{tpu_custom_call.1} parent=1 // pred_check_branch
      %348 = sbr.rel (0) target = $region73
    $region72: #{tpu_custom_call.1} parent=1 // pred_region
      %349 = dma.done [#allocation15], 16
    $region73: #{tpu_custom_call.1} parent=1 // pred_fallthru
      _
    // Predicated region
    $region74: #{tpu_custom_call.1} parent=1 // pred_check
      _
    $region75: #{tpu_custom_call.1} parent=1 // pred_check_branch
      %351 = sbr.rel (0) target = $region77
    $region76: #{tpu_custom_call.1} parent=1 // pred_region
      %352 = dma.done [#allocation15], 16
    $region77: #{tpu_custom_call.1} parent=1 // pred_fallthru
      _
    %353 = vsyncpa [#allocation3], 1
    %354 = vsyncpa [#allocation6], 1
    %355 = vsyncpa [#allocation9], 1
    %356 = vsyncpa [#allocation12], 1
    %357 = vsyncpa [#allocation4], 1
    %358 = vsyncpa [#allocation15], 1

</llo_original>
